<compile_context>
chip_gen: v7x
topology: tpu7x:2x2x1
jax: 0.10.0
libtpu: 0.0.40
codegen_flags: <defaults>
</compile_context>

<pallas_src>
import jax
import jax.numpy as jnp
from jax.experimental import pallas as pl
from jax.experimental.pallas import tpu as pltpu


def _embeddings_kernel(cls_ref, x_ref, o_ref):
    # cls_ref: (1, hidden)              -- resident classifier token
    # x_ref  : (B_TILE, seq*hidden)     -- flattened batch tile of tokens
    # o_ref  : (B_TILE, (seq+1)*hidden) -- flattened output tile
    b_tile = x_ref.shape[0]
    hidden = cls_ref.shape[1]
    flat_in = x_ref.shape[1]

    # One broadcast multi-sublane store for the whole batch tile (instead of
    # one masked single-row store per batch element).
    o_ref[:, pl.ds(0, hidden)] = jnp.broadcast_to(cls_ref[...], (b_tile, hidden))

    # Whole-sequence copy at a static lane offset of `hidden`.  Lane-tile
    # aligned (plain unmasked vld/vst, no XLU shifts) whenever hidden % 128 == 0.
    o_ref[:, pl.ds(hidden, flat_in)] = x_ref[...]


def _pick_batch_tile(bs, row_bytes, target_bytes=4 << 20):
    """Largest divisor of bs that (a) satisfies Mosaic's (8,128) block rule for
    the second-minor dim (multiple of 8, or the full batch) and (b) keeps the
    input block under `target_bytes`.  Falls back to the smallest legal divisor."""
    legal = [d for d in range(1, bs + 1)
             if bs % d == 0 and (d % 8 == 0 or d == bs)]
    fitting = [d for d in legal if d * row_bytes <= target_bytes]
    if fitting:
        b_tile = max(fitting)
        # Prefer >= 2 grid steps so the batch axis can be sharded across the
        # two v7x TensorCores (no-op on single-core v5e / v6e).
        if b_tile == bs and bs > 1:
            smaller = [d for d in fitting if d < bs]
            if smaller:
                b_tile = max(smaller)
        return b_tile
    # Nothing fits the soft target; take the smallest legal block.
    # TODO(synk): for extreme shapes (very long seq * f32) add a seq-tiling
    # grid axis instead of growing the batch block.
    return min(legal)


def embeddings_forward(x, cls_token):
    """x: (bs, seq, hidden); cls_token: (1, 1, hidden) -> (bs, seq+1, hidden)."""
    bs, seq, hidden = x.shape
    dtype = x.dtype
    itemsize = jnp.dtype(dtype).itemsize

    f_in = seq * hidden
    f_out = (seq + 1) * hidden

    # Free, contiguous reshapes (layout plumbing in the wrapper).
    x2d = x.reshape(bs, f_in)
    cls2d = cls_token.reshape(1, hidden).astype(dtype)

    b_tile = _pick_batch_tile(bs, f_in * itemsize)
    grid = (bs // b_tile,)

    # Explicit VMEM budget: double-buffered input + output blocks plus the
    # resident cls block, with ~1 MiB headroom; clamped to a range valid on
    # v5e/v6e (128 MiB VMEM) and v7x (64 MiB VMEM).
    vmem_need = 2 * (b_tile * (f_in + f_out) + hidden) * itemsize + (1 << 20)
    vmem_limit = int(min(max(vmem_need, 16 << 20), 48 << 20))

    out2d = pl.pallas_call(
        _embeddings_kernel,
        out_shape=jax.ShapeDtypeStruct((bs, f_out), dtype),
        grid_spec=pltpu.PrefetchScalarGridSpec(
            num_scalar_prefetch=0,
            grid=grid,
            in_specs=[
                # Constant block index -> cls token stays resident, no re-DMA.
                pl.BlockSpec((1, hidden), lambda b: (0, 0)),
                pl.BlockSpec((b_tile, f_in), lambda b: (b, 0)),
            ],
            out_specs=pl.BlockSpec((b_tile, f_out), lambda b: (b, 0)),
        ),
        compiler_params=pltpu.CompilerParams(
            dimension_semantics=("parallel",),
            vmem_limit_bytes=vmem_limit,
        ),
    )(cls2d, x2d)

    return out2d.reshape(bs, seq + 1, hidden)


if __name__ == "__main__":
    key = jax.random.PRNGKey(0)
    kx, kc = jax.random.split(key)

    bs, seq, hidden = 2, 8, 32
    x = jax.random.normal(kx, (bs, seq, hidden), dtype=jnp.float32)

    # nn.Parameter(torch.zeros(1, 1, hidden_size)) -> zeros at init; use random
    # values so the cls-copy path is actually exercised.
    cls_token = jax.random.normal(kc, (1, 1, hidden), dtype=jnp.float32)

    out = embeddings_forward(x, cls_token)
    out = jax.block_until_ready(out)

    # Reference semantics: torch.cat((cls.expand(bs,-1,-1), x), dim=1)
    ref = jnp.concatenate(
        (jnp.broadcast_to(cls_token, (bs, 1, hidden)), x), axis=1
    )
    assert out.shape == (bs, seq + 1, hidden), out.shape
    assert out.dtype == x.dtype
    assert jnp.array_equal(out, ref), "mismatch vs reference concat"

    print("KERNEL_OK")
</pallas_src>

<mosaic_0001>
module attributes {stable_mosaic.version = 11 : i64} {
  func.func @_embeddings_kernel(%arg0: i32, %arg1: memref<1x32xf32, #tpu.memory_space<vmem>>, %arg2: memref<2x256xf32, #tpu.memory_space<vmem>>, %arg3: memref<2x288xf32, #tpu.memory_space<vmem>>) attributes {dimension_semantics = [#tpu.dimension_semantics<parallel>], iteration_bounds = array<i64: 1>, scalar_prefetch = 0 : i64, scratch_operands = 0 : i64, tpu.core_type = #tpu.core_type<tc>, window_params = [{pipeline_mode = #tpu.pipeline_mode<synchronous>, transform_indices = @transform_0, window_bounds = array<i64: 1, 32>}, {transform_indices = @transform_1, window_bounds = array<i64: 2, 256>}, {transform_indices = @transform_2, window_bounds = array<i64: 2, 288>}]} {
    %c0 = arith.constant 0 : index
    %c0_0 = arith.constant 0 : index
    %0 = vector.load %arg1[%c0, %c0_0] : memref<1x32xf32, #tpu.memory_space<vmem>>, vector<1x32xf32>
    %1 = vector.shape_cast %0 : vector<1x32xf32> to vector<1x32xf32>
    %2 = vector.broadcast %1 : vector<1x32xf32> to vector<2x32xf32>
    %c0_1 = arith.constant 0 : index
    %c0_2 = arith.constant 0 : index
    %3 = vector.load %arg3[%c0_1, %c0_2] : memref<2x288xf32, #tpu.memory_space<vmem>>, vector<2x32xf32>
    tpu.vector_store %arg3[%c0_1, %c0_2], %2 {strides = array<i32>} : memref<2x288xf32, #tpu.memory_space<vmem>>, vector<2x32xf32>,
    %c0_3 = arith.constant 0 : index
    %c0_4 = arith.constant 0 : index
    %4 = vector.load %arg2[%c0_3, %c0_4] : memref<2x256xf32, #tpu.memory_space<vmem>>, vector<2x256xf32>
    %c0_5 = arith.constant 0 : index
    %c32 = arith.constant 32 : index
    %5 = vector.load %arg3[%c0_5, %c32] : memref<2x288xf32, #tpu.memory_space<vmem>>, vector<2x256xf32>
    tpu.vector_store %arg3[%c0_5, %c32], %4 {strides = array<i32>} : memref<2x288xf32, #tpu.memory_space<vmem>>, vector<2x256xf32>,
    return
  }
  func.func @transform_0(%arg0: i32) -> (i32, i32) {
    %c0_i32 = arith.constant 0 : i32
    %c0_i32_0 = arith.constant 0 : i32
    %c0_i32_1 = arith.constant 0 : i32
    return %c0_i32, %c0_i32_0 : i32, i32
  }
  func.func @transform_1(%arg0: i32) -> (i32, i32) {
    %c0_i32 = arith.constant 0 : i32
    %c0_i32_0 = arith.constant 0 : i32
    return %arg0, %c0_i32 : i32, i32
  }
  func.func @transform_2(%arg0: i32) -> (i32, i32) {
    %c0_i32 = arith.constant 0 : i32
    %c0_i32_0 = arith.constant 0 : i32
    return %arg0, %c0_i32 : i32, i32
  }
}

</mosaic_0001>

<llo_original>
// kernel: tpu_custom_call.1
$region0: #{tpu_custom_call.1}
  #allocation0 [shape = 'u32[]', space=smem, size = 0x4, offset = 0x4, fixed_abs, tag = 'smem constant byte address 0x4 - core index']
  #allocation1 [shape = 'u32[144,128]{1,0:T(1,128)}', space=vmem, size = 0x12000, scoped, tag = 'internal scratch']
  %s0 = inlined_call_operand.hbm [shape: f32[1,32], index: 0, kind: input, shape index: {}]
  %s1 = inlined_call_operand.hbm [shape: f32[2,256], index: 1, kind: input, shape index: {}]
  %s2 = inlined_call_operand.hbm [shape: f32[2,288], index: 2, kind: output, shape index: {}]
  %s3 = sld [smem:[#allocation0]]
  $region26: #{tpu_custom_call.1} parent=0
    _
  %s5 = ssub.s32 1, %s3
  %s6 = scalar_select 0, %s5, %s3
  $region1: #{tpu_custom_call.1} parent=0
    #allocation2 [shape = 'u8[512]{0}', space=vmem, size = 0x400, scoped, tag = 'input window, operand 0, single buffered']
    #allocation3 [shape = 's32[1]{0}', space=sflag, size = 0x4, scoped, tag = 'scoped memory for tpu_custom_call.1']
    #allocation4 [shape = 's32[1]{0}', space=sflag, size = 0x4, scoped, tag = 'scoped memory for tpu_custom_call.1']
    #allocation5 [shape = 'u8[2048]{0}', space=vmem, size = 0x800, scoped, tag = 'input window, operand 1, single buffered']
    #allocation6 [shape = 's32[1]{0}', space=sflag, size = 0x4, scoped, tag = 'scoped memory for tpu_custom_call.1']
    #allocation7 [shape = 'u8[3072]{0}', space=vmem, size = 0xc00, scoped, tag = 'output window, operand 0, single buffered']
    %7 = vsyncpa [#allocation3], 0
    %8 = vsyncpa [#allocation6], 0
    %9 = vsyncpa [#allocation4], 0
    // Predicated region
    $region2: #{tpu_custom_call.1} parent=1 // pred_check
      _
    $region3: #{tpu_custom_call.1} parent=1 // pred_check_branch
      %11 = sbr.rel (0) target = $region5
    $region4: #{tpu_custom_call.1} parent=1 // pred_region
      %s13 = ssub.s32 16, 16
      %14 = vsyncadd [#allocation3], %s13
      %s16 = sshll.u32 [#allocation2], 4
      %s17 = int_to_ptr.vmem [resolvable:$true] %s16
      %19 = dma.hbm_to_vmem [thread:$0]  %s0, 16, %s17, [#allocation3]
    $region5: #{tpu_custom_call.1} parent=1 // pred_fallthru
      _
    // Predicated region
    $region6: #{tpu_custom_call.1} parent=1 // pred_check
      _
    $region7: #{tpu_custom_call.1} parent=1 // pred_check_branch
      %21 = sbr.rel (0) target = $region9
    $region8: #{tpu_custom_call.1} parent=1 // pred_region
      %s23 = ssub.s32 64, 64
      %24 = vsyncadd [#allocation6], %s23
      %s26 = sshll.u32 [#allocation5], 4
      %s27 = int_to_ptr.vmem [resolvable:$true] %s26
      %29 = dma.hbm_to_vmem [thread:$0]  %s1, 64, %s27, [#allocation6]
    $region9: #{tpu_custom_call.1} parent=1 // pred_fallthru
      _
    // Predicated region
    $region10: #{tpu_custom_call.1} parent=1 // pred_check
      _
    $region11: #{tpu_custom_call.1} parent=1 // pred_check_branch
      %31 = sbr.rel (0) target = $region13
    $region12: #{tpu_custom_call.1} parent=1 // pred_region
      %32 = dma.done [#allocation3], 16
    $region13: #{tpu_custom_call.1} parent=1 // pred_fallthru
      _
    // Predicated region
    $region14: #{tpu_custom_call.1} parent=1 // pred_check
      _
    $region15: #{tpu_custom_call.1} parent=1 // pred_check_branch
      %34 = sbr.rel (0) target = $region17
    $region16: #{tpu_custom_call.1} parent=1 // pred_region
      %35 = dma.done [#allocation6], 64
    $region17: #{tpu_custom_call.1} parent=1 // pred_fallthru
      _
    %v36 = vld [vmem:[#allocation2] sm:$0x1]
    %v38 = vlaneseq
    %v39 = vshrl.u32 %v38, 7
    %v40 = vsub.s32 0, %v39
    %v41 = vrot.slane %v36, %v40
    %vm43 = vcmask 254976
    %44 = vst.msk [vmem:[#allocation7] sm:$0x3] %vm43, %v41
    %v45 = vld [vmem:[#allocation5] sm:$0xf]
    %47 = vrot.lane.b32.xlu0 %v45, 32
    %v48 = vpop.permute.xlu0 %47
    %v49 = vrot.slane %v48, 6
    %vm50 = vcmask 261120
    %v51 = vsel %vm50, %v49, %v48
    %vm53 = vcmask 1041664
    %vm54 = vcmask 1043458
    %vm55 = vmor %vm54, %vm53
    %vm56 = vcmask 259076
    %vm57 = vmor %vm56, %vm55
    %58 = vst.msk [vmem:[#allocation7] sm:$0x3f] %vm57, %v51
    // Predicated region
    $region18: #{tpu_custom_call.1} parent=1 // pred_check
      _
    $region19: #{tpu_custom_call.1} parent=1 // pred_check_branch
      %60 = sbr.rel (0) target = $region21
    $region20: #{tpu_custom_call.1} parent=1 // pred_region
      %s62 = ssub.s32 96, 96
      %63 = vsyncadd [#allocation4], %s62
      %s65 = sshll.u32 [#allocation7], 4
      %s66 = int_to_ptr.vmem [resolvable:$true] %s65
      %68 = dma.vmem_to_hbm [thread:$0]  %s66, 96, %s2, [#allocation4]
    $region21: #{tpu_custom_call.1} parent=1 // pred_fallthru
      _
    // Predicated region
    $region22: #{tpu_custom_call.1} parent=1 // pred_check
      _
    $region23: #{tpu_custom_call.1} parent=1 // pred_check_branch
      %70 = sbr.rel (0) target = $region25
    $region24: #{tpu_custom_call.1} parent=1 // pred_region
      %71 = dma.done [#allocation4], 96
    $region25: #{tpu_custom_call.1} parent=1 // pred_fallthru
      _
    %72 = vsyncpa [#allocation3], 1
    %73 = vsyncpa [#allocation6], 1
    %74 = vsyncpa [#allocation4], 1

</llo_original>
